<compile_context>
chip_gen: v7x
topology: tpu7x:2x2x1
jax: 0.10.0
libtpu: 0.0.40
codegen_flags: <defaults>
</compile_context>

<pallas_src>
import functools

import numpy as np
import jax
import jax.numpy as jnp
from jax.experimental import pallas as pl
from jax.experimental.pallas import tpu as pltpu

_MIB = 1024 * 1024


# --------------------------------------------------------------------------
# Hardware-aware sizing helpers.
# --------------------------------------------------------------------------
def _is_v7x():
    try:
        kind = jax.devices()[0].device_kind.lower()
    except Exception:
        return False
    return ("v7" in kind) or ("7x" in kind)


def _vmem_budget():
    """Per-kernel VMEM budget (bytes), with headroom below physical capacity."""
    cap = None
    try:
        cap = int(pltpu.get_tpu_info().vmem_capacity_bytes)
    except Exception:
        cap = None
    if cap is None:
        cap = 64 * _MIB if _is_v7x() else 128 * _MIB
    if cap <= 64 * _MIB:            # v7x: 64 MiB physical — leave compiler headroom
        return 52 * _MIB
    return 100 * _MIB               # v5e / v6e: 128 MiB physical


def _vmem_limit(need_bytes, budget):
    return int(min(budget, max(int(1.25 * need_bytes), 16 * _MIB)))


def _agg_tile_bytes(t, out_pad, isz, a_isz):
    """VMEM footprint of the streamed aggregation tiles at square tile t."""
    return (2 * t * t * a_isz          # A tiles (double-buffered, int8)
            + 2 * t * out_pad * isz    # XW tiles
            + 2 * out_pad * 4          # bias
            + 2 * t * out_pad * 4)     # f32 output tile


def _choose_tile(n, out_pad, isz, a_isz, budget, max_tile):
    """Square A tile (multiple of 128, TM == TK) sized against the VMEM budget."""
    cands = [t for t in (2048, 1024, 512, 256, 128) if t <= max_tile] or [128]
    if n <= cands[0]:
        t = int(pl.cdiv(n, 128) * 128)      # one tile covers the whole padded graph
        if _agg_tile_bytes(t, out_pad, isz, a_isz) <= budget // 2:
            return t
    best_t, best_key = None, None
    for t in cands:
        if _agg_tile_bytes(t, out_pad, isz, a_isz) > budget // 2:
            continue
        n_pad = int(pl.cdiv(n, t) * t)
        key = (n_pad, -t)                   # least padding first, then biggest tile
        if best_key is None or key < best_key:
            best_t, best_key = t, key
    if best_t is None:
        # TODO(synk): also tile out_pad when even a 128-wide A tile overflows VMEM.
        best_t = cands[-1]
    return best_t


def _pad2(arr, rows, cols):
    pr, pc = rows - arr.shape[0], cols - arr.shape[1]
    if pr or pc:
        arr = jnp.pad(arr, ((0, pr), (0, pc)))
    return arr


# --------------------------------------------------------------------------
# Fused kernel: XW computed into persistent VMEM during the i == 0 sweep,
# then OUT[i] = act(sum_k A[i, k] @ XW[k] [+ XW[i]]) + bias.
# --------------------------------------------------------------------------
def _fused_kernel(flag_ref, x_ref, w_ref, a_ref, b_ref, o_ref, xw_ref, *,
                  activation):
    i = pl.program_id(0)              # output row tile
    k = pl.program_id(1)              # reduction over A column tiles
    nk = pl.num_programs(1)

    # First row sweep: XW[k] = x[k] @ W, kept in f32 VMEM (no HBM round trip,
    # full precision for the aggregation).
    @pl.when(i == 0)
    def _compute_xw():
        xw_ref[k] = jnp.dot(x_ref[...], w_ref[...],
                            preferred_element_type=jnp.float32)

    @pl.when(k == 0)
    def _init():
        o_ref[...] = jnp.zeros_like(o_ref)

    xw_k = xw_ref[k]
    # A is stored as int8 (0/1 exact); cast in-kernel, accumulate in f32
    # directly into the resident output tile (no separate acc scratch).
    o_ref[...] += jnp.dot(a_ref[...].astype(jnp.float32), xw_k,
                          preferred_element_type=jnp.float32)

    # Self-loop fold: (A + I) @ XW == A @ XW + XW, diagonal tiles only,
    # gated by the *global* (a[0,0] == 0) scalar-prefetched flag.
    @pl.when((flag_ref[0] != 0) & (k == i))
    def _self_loop():
        o_ref[...] += xw_k

    # Epilogue: activation first, then bias (matches the PyTorch module).
    @pl.when(k == nk - 1)
    def _epilogue():
        out = o_ref[...]
        if activation == "relu":
            act = jnp.maximum(out, 0.0)
        else:                          # "tanh"
            act = jnp.tanh(out)
        o_ref[...] = act + b_ref[...]


# --------------------------------------------------------------------------
# Two-pass fallback (XW too large to stay VMEM-resident).
# --------------------------------------------------------------------------
def _xw_kernel(x_ref, w_ref, xw_ref, acc_ref):
    kk = pl.program_id(1)

    @pl.when(kk == 0)
    def _init():
        acc_ref[...] = jnp.zeros_like(acc_ref)

    acc_ref[...] += jnp.dot(x_ref[...], w_ref[...],
                            preferred_element_type=jnp.float32)

    @pl.when(kk == pl.num_programs(1) - 1)
    def _store():
        xw_ref[...] = acc_ref[...].astype(xw_ref.dtype)


def _agg_kernel(flag_ref, a_ref, xw_ref, b_ref, o_ref, *, activation):
    i = pl.program_id(0)
    k = pl.program_id(1)
    nk = pl.num_programs(1)

    @pl.when(k == 0)
    def _init():
        o_ref[...] = jnp.zeros_like(o_ref)

    # int8 A tile -> compute dtype right before the dot; f32 accumulation into
    # the resident f32 output tile.
    o_ref[...] += jnp.dot(a_ref[...].astype(xw_ref.dtype), xw_ref[...],
                          preferred_element_type=jnp.float32)

    @pl.when((flag_ref[0] != 0) & (k == i))
    def _self_loop():
        o_ref[...] += xw_ref[...].astype(jnp.float32)

    @pl.when(k == nk - 1)
    def _epilogue():
        out = o_ref[...]
        if activation == "relu":
            act = jnp.maximum(out, 0.0)
        else:
            act = jnp.tanh(out)
        o_ref[...] = act + b_ref[...]


# --------------------------------------------------------------------------
# Wrapper.
# --------------------------------------------------------------------------
def graph_conv(x, a, weight, bias, activation="relu",
               compute_dtype=jnp.bfloat16, a_dtype=jnp.int8,
               max_tile=2048, force_two_pass=False):
    """x: (N, in_dim), a: (N, N), weight: (in_dim, out_dim), bias: (out_dim,)
    -> (N, out_dim) float32.

    a_dtype is the HBM storage dtype of the adjacency (int8 is exact for 0/1
    graphs; pass a float dtype for weighted adjacencies)."""
    n, in_dim = x.shape
    out_dim = weight.shape[1]
    assert a.shape == (n, n) and weight.shape[0] == in_dim and bias.shape == (out_dim,)
    if activation not in ("relu", "tanh"):
        raise ValueError(f"unsupported activation: {activation}")

    isz = jnp.dtype(compute_dtype).itemsize
    a_isz = jnp.dtype(a_dtype).itemsize
    budget = _vmem_budget()

    out_pad = int(pl.cdiv(out_dim, 128) * 128)        # lane-dense output slab
    tn = _choose_tile(n, out_pad, isz, a_isz, budget, max_tile)
    n_pad = int(pl.cdiv(n, tn) * tn)                  # zero-pad N to a tile multiple
    nt = n_pad // tn                                  # row tiles == reduction tiles

    # Global self-loop condition (a[0,0] == 0), scalar-prefetched into SMEM —
    # a tile-local a_ref[0, 0] would be wrong once A is tiled.
    flag = (a[0, 0] == 0).astype(jnp.int32).reshape((1,))

    # Operand padding / storage casts (all pads are zeros -> exact math).
    a_p = _pad2(a, n_pad, n_pad).astype(a_dtype)
    x_p = _pad2(x, n_pad, in_dim).astype(compute_dtype)
    w_p = _pad2(weight, in_dim, out_pad).astype(compute_dtype)
    b_p = jnp.pad(bias, (0, out_pad - out_dim)).astype(jnp.float32).reshape(1, out_pad)

    fused_need = (nt * tn * out_pad * 4          # persistent f32 XW scratch
                  + 2 * tn * in_dim * isz        # x tiles
                  + 2 * in_dim * out_pad * isz   # W (resident)
                  + 2 * tn * tn * a_isz          # A tiles
                  + 2 * out_pad * 4              # bias
                  + 2 * tn * out_pad * 4)        # output tiles
    use_fused = (not force_two_pass) and fused_need <= budget

    if use_fused:
        kernel = functools.partial(_fused_kernel, activation=activation)
        out_padded = pl.pallas_call(
            kernel,
            out_shape=jax.ShapeDtypeStruct((n_pad, out_pad), jnp.float32),
            grid_spec=pltpu.PrefetchScalarGridSpec(
                num_scalar_prefetch=1,
                grid=(nt, nt),                        # rows outer, reduction inner
                in_specs=[
                    # x[k] is only needed during the i == 0 sweep; pin the
                    # block index afterwards so it is not re-streamed.
                    pl.BlockSpec((tn, in_dim),
                                 lambda i, k, _f: (jnp.where(i == 0, k, 0), 0)),
                    pl.BlockSpec((in_dim, out_pad), lambda i, k, _f: (0, 0)),
                    pl.BlockSpec((tn, tn), lambda i, k, _f: (i, k)),
                    pl.BlockSpec((1, out_pad), lambda i, k, _f: (0, 0)),
                ],
                out_specs=pl.BlockSpec((tn, out_pad), lambda i, k, _f: (i, 0)),
                scratch_shapes=[pltpu.VMEM((nt, tn, out_pad), jnp.float32)],
            ),
            compiler_params=pltpu.CompilerParams(
                # Row tiles i > 0 reuse XW computed during the i == 0 sweep,
                # so the row axis must stay sequential in the fused kernel.
                dimension_semantics=("arbitrary", "arbitrary"),
                vmem_limit_bytes=_vmem_limit(fused_need, budget),
            ),
            cost_estimate=pl.CostEstimate(
                flops=2 * n_pad * in_dim * out_pad + 2 * n_pad * n_pad * out_pad,
                transcendentals=(n_pad * out_pad) if activation == "tanh" else 0,
                bytes_accessed=(n_pad * in_dim * isz + in_dim * out_pad * isz
                                + n_pad * n_pad * a_isz + n_pad * out_pad * 4),
            ),
        )(flag, x_p, w_p, a_p, b_p)
    else:
        # v7x: split row tiles across the 2 TensorCores.
        if _is_v7x() and nt >= 2:
            row_sem, red_sem = pltpu.CORE_PARALLEL, pltpu.ARBITRARY
        else:
            row_sem, red_sem = "parallel", "arbitrary"

        # ---- Pass 1: XW = x @ W (K-blocked over in_dim if W can't stay resident).
        if in_dim <= 2048 and (2 * tn * in_dim * isz
                               + 2 * in_dim * out_pad * isz) <= budget // 2:
            tki, in_pad = in_dim, in_dim
        else:
            tki = 512
            in_pad = int(pl.cdiv(in_dim, tki) * tki)
        nki = in_pad // tki
        if in_pad != in_dim:
            x_p = _pad2(x_p, n_pad, in_pad)
            w_p = _pad2(w_p, in_pad, out_pad)

        p1_need = (2 * tn * tki * isz + 2 * tki * out_pad * isz
                   + 2 * tn * out_pad * isz + tn * out_pad * 4)
        xw = pl.pallas_call(
            _xw_kernel,
            out_shape=jax.ShapeDtypeStruct((n_pad, out_pad), compute_dtype),
            grid=(nt, nki),
            in_specs=[
                pl.BlockSpec((tn, tki), lambda i, kk: (i, kk)),
                pl.BlockSpec((tki, out_pad), lambda i, kk: (kk, 0)),
            ],
            out_specs=pl.BlockSpec((tn, out_pad), lambda i, kk: (i, 0)),
            scratch_shapes=[pltpu.VMEM((tn, out_pad), jnp.float32)],
            compiler_params=pltpu.CompilerParams(
                dimension_semantics=(row_sem, red_sem),
                vmem_limit_bytes=_vmem_limit(p1_need, budget),
            ),
            cost_estimate=pl.CostEstimate(
                flops=2 * n_pad * in_pad * out_pad,
                transcendentals=0,
                bytes_accessed=(n_pad * in_pad * isz + in_pad * out_pad * isz
                                + n_pad * out_pad * isz),
            ),
        )(x_p, w_p)

        # ---- Pass 2: OUT = act(A @ XW [+ XW]) + bias, f32 accumulation in o_ref.
        p2_need = _agg_tile_bytes(tn, out_pad, isz, a_isz)
        kernel = functools.partial(_agg_kernel, activation=activation)
        out_padded = pl.pallas_call(
            kernel,
            out_shape=jax.ShapeDtypeStruct((n_pad, out_pad), jnp.float32),
            grid_spec=pltpu.PrefetchScalarGridSpec(
                num_scalar_prefetch=1,
                grid=(nt, nt),
                in_specs=[
                    pl.BlockSpec((tn, tn), lambda i, k, _f: (i, k)),
                    pl.BlockSpec((tn, out_pad), lambda i, k, _f: (k, 0)),
                    pl.BlockSpec((1, out_pad), lambda i, k, _f: (0, 0)),
                ],
                out_specs=pl.BlockSpec((tn, out_pad), lambda i, k, _f: (i, 0)),
            ),
            compiler_params=pltpu.CompilerParams(
                dimension_semantics=(row_sem, red_sem),
                vmem_limit_bytes=_vmem_limit(p2_need, budget),
            ),
            cost_estimate=pl.CostEstimate(
                flops=2 * n_pad * n_pad * out_pad,
                transcendentals=(n_pad * out_pad) if activation == "tanh" else 0,
                bytes_accessed=(n_pad * n_pad * a_isz + nt * n_pad * out_pad * isz
                                + n_pad * out_pad * 4),
            ),
        )(flag, a_p, xw, b_p)

    # TODO(synk): this trailing slice re-materialises the output in HBM; return
    # the padded (n_pad, out_pad) slab instead if the consumer can take it.
    return out_padded[:n, :out_dim]


def graph_conv_reference(x, a, weight, bias, activation="relu"):
    """Float64 NumPy reference matching the PyTorch forward."""
    a64 = np.asarray(a, dtype=np.float64)
    x64 = np.asarray(x, dtype=np.float64)
    w64 = np.asarray(weight, dtype=np.float64)
    b64 = np.asarray(bias, dtype=np.float64)
    if a64[0, 0] == 0:
        a64 = a64 + np.eye(a64.shape[0])
    out = a64 @ (x64 @ w64)
    act = np.maximum(out, 0.0) if activation == "relu" else np.tanh(out)
    return act + b64[None, :]


if __name__ == "__main__":
    key = jax.random.PRNGKey(0)
    kx, ka, kw, kb, kx2, ka2, kw2, kb2 = jax.random.split(key, 8)

    # --- Small graph (module-scale shapes): fused single-kernel path. --------
    N, IN_DIM, OUT_DIM = 16, 32, 16
    x = jax.random.normal(kx, (N, IN_DIM), dtype=jnp.float32)
    a_rand = jax.random.uniform(ka, (N, N)) < 0.3
    a = jnp.triu(a_rand.astype(jnp.float32), k=1)
    a = a + a.T                                   # symmetric 0/1, zero diagonal
    weight = 0.1 * jax.random.normal(kw, (IN_DIM, OUT_DIM), dtype=jnp.float32)
    bias = 0.1 * jax.random.normal(kb, (OUT_DIM,), dtype=jnp.float32)

    # 1) Default (bf16 compute, int8 A), relu, self-loop branch taken.
    out = jax.block_until_ready(graph_conv(x, a, weight, bias, activation="relu"))
    ref = graph_conv_reference(x, a, weight, bias, activation="relu")
    assert out.shape == (N, OUT_DIM)
    assert np.allclose(np.asarray(out), ref, atol=5e-2, rtol=5e-2)

    # 2) f32 compute, tanh, self-loop branch taken.
    out32 = jax.block_until_ready(
        graph_conv(x, a, weight, bias, activation="tanh", compute_dtype=jnp.float32))
    ref32 = graph_conv_reference(x, a, weight, bias, activation="tanh")
    assert np.allclose(np.asarray(out32), ref32, atol=1e-3, rtol=1e-3)

    # 3) Adjacency that already has self-loops (a[0,0] != 0) -> no identity add.
    a_loops = a + jnp.eye(N, dtype=jnp.float32)
    out_sl = jax.block_until_ready(
        graph_conv(x, a_loops, weight, bias, activation="relu",
                   compute_dtype=jnp.float32))
    ref_sl = graph_conv_reference(x, a_loops, weight, bias, activation="relu")
    assert np.allclose(np.asarray(out_sl), ref_sl, atol=1e-3, rtol=1e-3)

    # 4) Small graph through the two-pass fallback (bf16, forced).
    out_tp = jax.block_until_ready(
        graph_conv(x, a, weight, bias, activation="relu", force_two_pass=True))
    assert np.allclose(np.asarray(out_tp), ref, atol=5e-2, rtol=5e-2)

    # --- Larger, non-multiple-of-128 graph: padding + multi-tile grids. ------
    N2, IN2, OUT2 = 320, 64, 48
    x2 = jax.random.normal(kx2, (N2, IN2), dtype=jnp.float32)
    a2_rand = jax.random.uniform(ka2, (N2, N2)) < 0.1
    a2 = jnp.triu(a2_rand.astype(jnp.float32), k=1)
    a2 = a2 + a2.T
    w2 = 0.1 * jax.random.normal(kw2, (IN2, OUT2), dtype=jnp.float32)
    b2 = 0.1 * jax.random.normal(kb2, (OUT2,), dtype=jnp.float32)
    ref2_tanh = graph_conv_reference(x2, a2, w2, b2, activation="tanh")
    ref2_relu = graph_conv_reference(x2, a2, w2, b2, activation="relu")

    # 5) Fused path, multi-tile grid (tn=128 -> 3x3 tiles), padded N.
    out2f = jax.block_until_ready(
        graph_conv(x2, a2, w2, b2, activation="tanh", compute_dtype=jnp.float32,
                   max_tile=128))
    assert out2f.shape == (N2, OUT2)
    assert np.allclose(np.asarray(out2f), ref2_tanh, atol=1e-3, rtol=1e-3)

    # 6) Forced two-pass streamed path, tiled int8 adjacency, padded N.
    out2s = jax.block_until_ready(
        graph_conv(x2, a2, w2, b2, activation="relu", compute_dtype=jnp.float32,
                   max_tile=128, force_two_pass=True))
    assert np.allclose(np.asarray(out2s), ref2_relu, atol=1e-3, rtol=1e-3)

    print("KERNEL_OK")
</pallas_src>

<mosaic_0001>
module attributes {stable_mosaic.version = 11 : i64} {
  func.func @_fused_kernel(%arg0: i32, %arg1: i32, %arg2: memref<1xi32, #tpu.memory_space<smem>>, %arg3: memref<128x32xbf16, #tpu.memory_space<vmem>>, %arg4: memref<32x128xbf16, #tpu.memory_space<vmem>>, %arg5: memref<128x128xi8, #tpu.memory_space<vmem>>, %arg6: memref<1x128xf32, #tpu.memory_space<vmem>>, %arg7: memref<128x128xf32, #tpu.memory_space<vmem>>, %arg8: memref<1x128x128xf32, #tpu.memory_space<vmem>>) attributes {dimension_semantics = [#tpu.dimension_semantics<arbitrary>, #tpu.dimension_semantics<arbitrary>], iteration_bounds = array<i64: 1, 1>, scalar_prefetch = 1 : i64, scratch_operands = 1 : i64, tpu.core_type = #tpu.core_type<tc>, window_params = [{transform_indices = @transform_0, window_bounds = array<i64: 128, 32>}, {pipeline_mode = #tpu.pipeline_mode<synchronous>, transform_indices = @transform_1, window_bounds = array<i64: 32, 128>}, {transform_indices = @transform_2, window_bounds = array<i64: 128, 128>}, {pipeline_mode = #tpu.pipeline_mode<synchronous>, transform_indices = @transform_3, window_bounds = array<i64: 1, 128>}, {transform_indices = @transform_4, window_bounds = array<i64: 128, 128>}]} {
    %c0_i32 = arith.constant 0 : i32
    %0 = arith.cmpi eq, %arg0, %c0_i32 : i32
    %1 = arith.extui %0 : i1 to i32
    %c0_i32_0 = arith.constant 0 : i32
    %2 = arith.cmpi ne, %1, %c0_i32_0 : i32
    scf.if %2 {
      %c0_15 = arith.constant 0 : index
      %c0_16 = arith.constant 0 : index
      %24 = vector.load %arg3[%c0_15, %c0_16] : memref<128x32xbf16, #tpu.memory_space<vmem>>, vector<128x32xbf16>
      %c0_17 = arith.constant 0 : index
      %c0_18 = arith.constant 0 : index
      %25 = vector.load %arg4[%c0_17, %c0_18] : memref<32x128xbf16, #tpu.memory_space<vmem>>, vector<32x128xbf16>
      %cst_19 = arith.constant dense<0.000000e+00> : vector<128x128xf32>
      %26 = tpu.matmul %24, %25, %cst_19 {dimension_numbers = #tpu.dot_dimension_numbers<[1], [0], [0], [1], [0, 0, 1, 1], [], []>} : vector<128x32xbf16>, vector<32x128xbf16>, vector<128x128xf32> -> vector<128x128xf32>
      %27 = arith.index_cast %arg1 : i32 to index
      %c0_20 = arith.constant 0 : index
      %c0_21 = arith.constant 0 : index
      %28 = vector.load %arg8[%27, %c0_20, %c0_21] : memref<1x128x128xf32, #tpu.memory_space<vmem>>, vector<1x128x128xf32>
      %29 = vector.shape_cast %28 : vector<1x128x128xf32> to vector<128x128xf32>
      %30 = vector.shape_cast %26 : vector<128x128xf32> to vector<1x128x128xf32>
      tpu.vector_store %arg8[%27, %c0_20, %c0_21], %30 {strides = array<i32>} : memref<1x128x128xf32, #tpu.memory_space<vmem>>, vector<1x128x128xf32>,
    } else {
    }
    %c0_i32_1 = arith.constant 0 : i32
    %3 = arith.cmpi eq, %arg1, %c0_i32_1 : i32
    %4 = arith.extui %3 : i1 to i32
    %c0_i32_2 = arith.constant 0 : i32
    %5 = arith.cmpi ne, %4, %c0_i32_2 : i32
    scf.if %5 {
      %cst_15 = arith.constant 0.000000e+00 : f32
      %24 = vector.broadcast %cst_15 : f32 to vector<128x128xf32>
      %c0_16 = arith.constant 0 : index
      %c0_17 = arith.constant 0 : index
      %25 = vector.load %arg7[%c0_16, %c0_17] : memref<128x128xf32, #tpu.memory_space<vmem>>, vector<128x128xf32>
      tpu.vector_store %arg7[%c0_16, %c0_17], %24 {strides = array<i32>} : memref<128x128xf32, #tpu.memory_space<vmem>>, vector<128x128xf32>,
    } else {
    }
    %6 = arith.index_cast %arg1 : i32 to index
    %c0 = arith.constant 0 : index
    %c0_3 = arith.constant 0 : index
    %7 = vector.load %arg8[%6, %c0, %c0_3] : memref<1x128x128xf32, #tpu.memory_space<vmem>>, vector<1x128x128xf32>
    %8 = vector.shape_cast %7 : vector<1x128x128xf32> to vector<128x128xf32>
    %c0_4 = arith.constant 0 : index
    %c0_5 = arith.constant 0 : index
    %9 = vector.load %arg7[%c0_4, %c0_5] : memref<128x128xf32, #tpu.memory_space<vmem>>, vector<128x128xf32>
    %c0_6 = arith.constant 0 : index
    %c0_7 = arith.constant 0 : index
    %10 = vector.load %arg5[%c0_6, %c0_7] : memref<128x128xi8, #tpu.memory_space<vmem>>, vector<128x128xi8>
    %11 = arith.sitofp %10 : vector<128x128xi8> to vector<128x128xf32>
    %cst = arith.constant dense<0.000000e+00> : vector<128x128xf32>
    %12 = tpu.matmul %11, %8, %cst {dimension_numbers = #tpu.dot_dimension_numbers<[1], [0], [0], [1], [0, 0, 1, 1], [], []>} : vector<128x128xf32>, vector<128x128xf32>, vector<128x128xf32> -> vector<128x128xf32>
    %13 = arith.addf %9, %12 : vector<128x128xf32>
    %c0_8 = arith.constant 0 : index
    %c0_9 = arith.constant 0 : index
    %14 = vector.load %arg7[%c0_8, %c0_9] : memref<128x128xf32, #tpu.memory_space<vmem>>, vector<128x128xf32>
    tpu.vector_store %arg7[%c0_8, %c0_9], %13 {strides = array<i32>} : memref<128x128xf32, #tpu.memory_space<vmem>>, vector<128x128xf32>,
    %c0_10 = arith.constant 0 : index
    %15 = memref.load %arg2[%c0_10] : memref<1xi32, #tpu.memory_space<smem>>
    %c0_i32_11 = arith.constant 0 : i32
    %16 = arith.cmpi ne, %15, %c0_i32_11 : i32
    %17 = arith.cmpi eq, %arg1, %arg0 : i32
    %18 = arith.andi %16, %17 : i1
    %19 = arith.extui %18 : i1 to i32
    %c0_i32_12 = arith.constant 0 : i32
    %20 = arith.cmpi ne, %19, %c0_i32_12 : i32
    scf.if %20 {
      %c0_15 = arith.constant 0 : index
      %c0_16 = arith.constant 0 : index
      %24 = vector.load %arg7[%c0_15, %c0_16] : memref<128x128xf32, #tpu.memory_space<vmem>>, vector<128x128xf32>
      %25 = arith.addf %24, %8 : vector<128x128xf32>
      %c0_17 = arith.constant 0 : index
      %c0_18 = arith.constant 0 : index
      %26 = vector.load %arg7[%c0_17, %c0_18] : memref<128x128xf32, #tpu.memory_space<vmem>>, vector<128x128xf32>
      tpu.vector_store %arg7[%c0_17, %c0_18], %25 {strides = array<i32>} : memref<128x128xf32, #tpu.memory_space<vmem>>, vector<128x128xf32>,
    } else {
    }
    %c0_i32_13 = arith.constant 0 : i32
    %21 = arith.cmpi eq, %arg1, %c0_i32_13 : i32
    %22 = arith.extui %21 : i1 to i32
    %c0_i32_14 = arith.constant 0 : i32
    %23 = arith.cmpi ne, %22, %c0_i32_14 : i32
    scf.if %23 {
      %c0_15 = arith.constant 0 : index
      %c0_16 = arith.constant 0 : index
      %24 = vector.load %arg7[%c0_15, %c0_16] : memref<128x128xf32, #tpu.memory_space<vmem>>, vector<128x128xf32>
      %cst_17 = arith.constant 0.000000e+00 : f32
      %25 = vector.broadcast %cst_17 : f32 to vector<128x128xf32>
      %26 = arith.maximumf %24, %25 : vector<128x128xf32>
      %c0_18 = arith.constant 0 : index
      %c0_19 = arith.constant 0 : index
      %27 = vector.load %arg6[%c0_18, %c0_19] : memref<1x128xf32, #tpu.memory_space<vmem>>, vector<1x128xf32>
      %28 = vector.broadcast %27 : vector<1x128xf32> to vector<128x128xf32>
      %29 = arith.addf %26, %28 : vector<128x128xf32>
      %c0_20 = arith.constant 0 : index
      %c0_21 = arith.constant 0 : index
      %30 = vector.load %arg7[%c0_20, %c0_21] : memref<128x128xf32, #tpu.memory_space<vmem>>, vector<128x128xf32>
      tpu.vector_store %arg7[%c0_20, %c0_21], %29 {strides = array<i32>} : memref<128x128xf32, #tpu.memory_space<vmem>>, vector<128x128xf32>,
    } else {
    }
    return
  }
  func.func @transform_0(%arg0: i32, %arg1: i32, %arg2: memref<1xi32, #tpu.memory_space<smem>>) -> (i32, i32) {
    %c0_i32 = arith.constant 0 : i32
    %0 = arith.cmpi eq, %arg0, %c0_i32 : i32
    %c0_i32_0 = arith.constant 0 : i32
    %1 = arith.select %0, %arg1, %c0_i32_0 : i32
    %c0_i32_1 = arith.constant 0 : i32
    %c0_i32_2 = arith.constant 0 : i32
    return %1, %c0_i32_1 : i32, i32
  }
  func.func @transform_1(%arg0: i32, %arg1: i32, %arg2: memref<1xi32, #tpu.memory_space<smem>>) -> (i32, i32) {
    %c0_i32 = arith.constant 0 : i32
    %c0_i32_0 = arith.constant 0 : i32
    %c0_i32_1 = arith.constant 0 : i32
    return %c0_i32, %c0_i32_0 : i32, i32
  }
  func.func @transform_2(%arg0: i32, %arg1: i32, %arg2: memref<1xi32, #tpu.memory_space<smem>>) -> (i32, i32) {
    %c0_i32 = arith.constant 0 : i32
    return %arg0, %arg1 : i32, i32
  }
  func.func @transform_3(%arg0: i32, %arg1: i32, %arg2: memref<1xi32, #tpu.memory_space<smem>>) -> (i32, i32) {
    %c0_i32 = arith.constant 0 : i32
    %c0_i32_0 = arith.constant 0 : i32
    %c0_i32_1 = arith.constant 0 : i32
    return %c0_i32, %c0_i32_0 : i32, i32
  }
  func.func @transform_4(%arg0: i32, %arg1: i32, %arg2: memref<1xi32, #tpu.memory_space<smem>>) -> (i32, i32) {
    %c0_i32 = arith.constant 0 : i32
    %c0_i32_0 = arith.constant 0 : i32
    return %arg0, %c0_i32 : i32, i32
  }
}

</mosaic_0001>

<llo_original>
// kernel: tpu_custom_call.1
$region0: #{tpu_custom_call.1}
  #allocation0 [shape = 'u32[]', space=smem, size = 0x4, offset = 0x4, fixed_abs, tag = 'smem constant byte address 0x4 - core index']
  #allocation1 [shape = 'u32[144,128]{1,0:T(1,128)}', space=vmem, size = 0x12000, scoped, tag = 'internal scratch']
  #allocation2 [shape = 'f32[1,128,128]{2,1,0:T(8,128)}', space=vmem, size = 0x10000, scoped, tag = 'scratch operand']
  #allocation3 [shape = 's32[1]{0}', space=sflag, size = 0x4, scoped, tag = 'scoped memory for tpu_custom_call.1']
  #allocation4 [shape = 's32[1]{0:T(128)S(6)}', space=smem, size = 0x200, scoped, tag = 'prefetched SMEM operand 0']
  %s0 = inlined_call_operand.<no memory space> [shape: s32[1], index: 0, kind: input, shape index: {}]
  %s1 = inlined_call_operand.vmem [shape: bf16[128,32], index: 1, kind: input, shape index: {}]
  %s2 = inlined_call_operand.vmem [shape: bf16[32,128], index: 2, kind: input, shape index: {}]
  %s3 = inlined_call_operand.vmem [shape: s8[128,128], index: 3, kind: input, shape index: {}]
  %s4 = inlined_call_operand.vmem [shape: f32[1,128], index: 4, kind: input, shape index: {}]
  %s5 = inlined_call_operand.hbm [shape: f32[128,128], index: 5, kind: output, shape index: {}]
  %s6 = sld [smem:[#allocation0]]
  $region42: #{tpu_custom_call.1} parent=0
    _
  %s8 = ssub.s32 1, %s6
  %s9 = scalar_select 0, %s8, %s6
  %10 = sst [smem:[#allocation4]] %s0
  $region1: #{tpu_custom_call.1} parent=0
    #allocation5 [shape = 'u8[65536]{0}', space=vmem, size = 0x10000, scoped, tag = 'output window, operand 0, single buffered']
    #allocation6 [shape = 's32[1]{0}', space=sflag, size = 0x4, scoped, tag = 'scoped memory for tpu_custom_call.1']
    %11 = vsyncpa [#allocation6], 0
    // Predicated region
    $region2: #{tpu_custom_call.1} parent=1 // pred_check
      _
    $region3: #{tpu_custom_call.1} parent=1 // pred_check_branch
      %13 = sbr.rel (0) target = $region5
    $region4: #{tpu_custom_call.1} parent=1 // pred_region
      %p14 = scmp.eq.s32.totalorder 0, 0
      %s15 = scalar_select %p14, 0, 0
      %s16 = smul.u32 16, %s15
      %p17 = scmp.lt.s32.totalorder %s16, 15
      %s18 = scalar_select %p17, %s16, 15
      %s19 = smul.addr %s18, 4
      %s20 = scalar_lea.vmem %s1, %s19
      %p21 = scmp.eq.s32.totalorder 0, 0
      %s22 = scalar_select %p21, 0, 0
      %s23 = smul.u32 16, %s22
    $region5: #{tpu_custom_call.1} parent=1 // pred_fallthru
      _
    // Predicated region
    $region6: #{tpu_custom_call.1} parent=1 // pred_check
      _
    $region7: #{tpu_custom_call.1} parent=1 // pred_check_branch
      %25 = sbr.rel (0) target = $region9
    $region8: #{tpu_custom_call.1} parent=1 // pred_region
      _
    $region9: #{tpu_custom_call.1} parent=1 // pred_fallthru
      _
    // Predicated region
    $region10: #{tpu_custom_call.1} parent=1 // pred_check
      _
    $region11: #{tpu_custom_call.1} parent=1 // pred_check_branch
      %27 = sbr.rel (0) target = $region13
    $region12: #{tpu_custom_call.1} parent=1 // pred_region
      _
    $region13: #{tpu_custom_call.1} parent=1 // pred_fallthru
      _
    // Predicated region
    $region14: #{tpu_custom_call.1} parent=1 // pred_check
      _
    $region15: #{tpu_custom_call.1} parent=1 // pred_check_branch
      %29 = sbr.rel (0) target = $region17
    $region16: #{tpu_custom_call.1} parent=1 // pred_region
      _
    $region17: #{tpu_custom_call.1} parent=1 // pred_fallthru
      _
    %p30 = scmp.eq.s32.totalorder 0, 0
    %s31 = scalar_select %p30, 0, 0
    %s32 = smul.u32 16, %s31
    %p33 = scmp.lt.s32.totalorder %s32, 15
    %s34 = scalar_select %p33, %s32, 15
    %s35 = smul.addr %s34, 4
    %s36 = scalar_lea.vmem %s1, %s35
    %p37 = scmp.eq.s32.totalorder 0, 0
    %s38 = scalar_select %p37, 0, 0
    %s39 = smul.u32 16, %s38
    %p40 = scmp.lt.s32.totalorder %s39, 15
    %s41 = scalar_select %p40, %s39, 15
    %s42 = smul.addr %s41, 4
    %s43 = scalar_lea.vmem %s1, %s42
    %p44 = scmp.eq.s32.totalorder 0, 0
    %s45 = scalar_select %p44, 0, 0
    %s46 = smul.u32 16, %s45
    %p48 = scmp.eq.s32.totalorder 0, 0
    // Predicated region
    $region18: #{tpu_custom_call.1} parent=1 // pred_check
      %p49 = pneg %p48
    $region19: #{tpu_custom_call.1} parent=1 // pred_check_branch
      %51 = sbr.rel (%p49) target = $region21
    $region20: #{tpu_custom_call.1} parent=1 // pred_region
      %v52 = vld [vmem:[%s43] sm:$0xf]
      %v53 = vld [vmem:[%s43 + $0x4] sm:$0xf]
      %v54 = vld [vmem:[%s43 + $0x8] sm:$0xf]
      %v55 = vld [vmem:[%s43 + $0xc] sm:$0xf]
      %v56 = vld [vmem:[%s43 + $0x10] sm:$0xf]
      %v57 = vld [vmem:[%s43 + $0x14] sm:$0xf]
      %v58 = vld [vmem:[%s43 + $0x18] sm:$0xf]
      %v59 = vld [vmem:[%s43 + $0x1c] sm:$0xf]
      %v60 = vld [vmem:[%s43 + $0x20] sm:$0xf]
      %v61 = vld [vmem:[%s43 + $0x24] sm:$0xf]
      %v62 = vld [vmem:[%s43 + $0x28] sm:$0xf]
      %v63 = vld [vmem:[%s43 + $0x2c] sm:$0xf]
      %v64 = vld [vmem:[%s43 + $0x30] sm:$0xf]
      %v65 = vld [vmem:[%s43 + $0x34] sm:$0xf]
      %v66 = vld [vmem:[%s43 + $0x38] sm:$0xf]
      %v67 = vld [vmem:[%s43 + $0x3c] sm:$0xf]
      %v68 = vld [vmem:[%s2] sm:$0xf]
      %v69 = vld [vmem:[%s2 + $0x4] sm:$0xf]
      %v70 = vld [vmem:[%s2 + $0x8] sm:$0xf]
      %v71 = vld [vmem:[%s2 + $0xc] sm:$0xf]
      %v88 = vunpack.c.l.b16 %v52
      %v89 = vunpack.c.l.b16 %v53
      %v90 = vunpack.c.l.b16 %v54
      %v91 = vunpack.c.l.b16 %v55
      %v92 = vunpack.c.l.b16 %v56
      %v93 = vunpack.c.l.b16 %v57
      %v94 = vunpack.c.l.b16 %v58
      %v95 = vunpack.c.l.b16 %v59
      %v96 = vunpack.c.l.b16 %v60
      %v97 = vunpack.c.l.b16 %v61
      %v98 = vunpack.c.l.b16 %v62
      %v99 = vunpack.c.l.b16 %v63
      %v100 = vunpack.c.l.b16 %v64
      %v101 = vunpack.c.l.b16 %v65
      %v102 = vunpack.c.l.b16 %v66
      %v103 = vunpack.c.l.b16 %v67
      %v104 = vpack.c.b16 %v89, %v88
      %v105 = vpack.c.b16 %v91, %v90
      %v106 = vpack.c.b16 %v93, %v92
      %v107 = vpack.c.b16 %v95, %v94
      %v108 = vpack.c.b16 %v97, %v96
      %v109 = vpack.c.b16 %v99, %v98
      %v110 = vpack.c.b16 %v101, %v100
      %v111 = vpack.c.b16 %v103, %v102
      %v116 = vunpack.c.l.b16 %v68
      %v117 = vunpack.c.l.b16 %v69
      %v118 = vunpack.c.l.b16 %v70
      %v119 = vunpack.c.l.b16 %v71
      %v120 = vpack.c.b16 %v117, %v116
      %v121 = vpack.c.b16 %v119, %v118
      %vm124 = vcmask 261120
      %v126 = vsel %vm124, %v104, 0
      %v129 = vsel %vm124, %v105, 0
      %v132 = vsel %vm124, %v106, 0
      %v135 = vsel %vm124, %v107, 0
      %v138 = vsel %vm124, %v108, 0
      %v141 = vsel %vm124, %v109, 0
      %v144 = vsel %vm124, %v110, 0
      %v147 = vsel %vm124, %v111, 0
      %149 = vmatprep.subr.bf16.mxu0 0
      %150 = vmatpush1.bf16.msra.mxu0 %v120
      %151 = vmatprep.subr.bf16.mxu0 0
      %152 = vmatpush1.bf16.msra.mxu0 %v121
      %153 = vmatprep.subr.bf16.mxu0 0
      %154 = vmatpush1.bf16.msra.mxu0 0
      %155 = vmatprep.subr.bf16.mxu0 0
      %156 = vmatpush1.bf16.msra.mxu0 0
      %157 = vmatprep.subr.bf16.mxu0 0
      %158 = vmatpush1.bf16.msra.mxu0 0
      %159 = vmatprep.subr.bf16.mxu0 0
      %160 = vmatpush1.bf16.msra.mxu0 0
      %161 = vmatprep.subr.bf16.mxu0 0
      %162 = vmatpush1.bf16.msra.mxu0 0
      %163 = vmatprep.subr.bf16.mxu0 0
      %164 = vmatpush1.bf16.msra.mxu0 0
      %165 = vmatprep.subr.bf16.mxu0 0
      %166 = vmatpush1.bf16.msra.mxu0 0
      %167 = vmatprep.subr.bf16.mxu0 0
      %168 = vmatpush1.bf16.msra.mxu0 0
      %169 = vmatprep.subr.bf16.mxu0 0
      %170 = vmatpush1.bf16.msra.mxu0 0
      %171 = vmatprep.subr.bf16.mxu0 0
      %172 = vmatpush1.bf16.msra.mxu0 0
      %173 = vmatprep.subr.bf16.mxu0 0
      %174 = vmatpush1.bf16.msra.mxu0 0
      %175 = vmatprep.subr.bf16.mxu0 0
      %176 = vmatpush1.bf16.msra.mxu0 0
      %177 = vmatprep.subr.bf16.mxu0 0
      %178 = vmatpush1.bf16.msra.mxu0 0
      %179 = vmatprep.subr.bf16.mxu0 0
      %180 = vmatpush1.bf16.msra.mxu0 0
      %181 = vmatprep.mubr.bf16.mxu0 0
      %182 = vmatmul.mubr.bf16.gmra.mrb[0].mxu0 %v126
      %v183 = vpop.f32.mrb[0].mxu0
      %v184 = vadd.f32 0.0, %v183
      %v185 = vpop.f32.mrb[0].mxu0
      %v186 = vpop.f32.mrb[0].mxu0
      %v187 = vadd.f32 0.0, %v186
      %v188 = vpop.f32.mrb[0].mxu0
      %189 = vmatprep.mubr.bf16.mxu0 0
      %190 = vmatmul.mubr.bf16.gmra.mrb[0].mxu0 %v129
      %v191 = vpop.f32.mrb[0].mxu0
      %v192 = vadd.f32 0.0, %v191
      %v193 = vpop.f32.mrb[0].mxu0
      %v194 = vpop.f32.mrb[0].mxu0
      %v195 = vadd.f32 0.0, %v194
      %v196 = vpop.f32.mrb[0].mxu0
      %197 = vmatprep.mubr.bf16.mxu0 0
      %198 = vmatmul.mubr.bf16.gmra.mrb[0].mxu0 %v132
      %v199 = vpop.f32.mrb[0].mxu0
      %v200 = vadd.f32 0.0, %v199
      %v201 = vpop.f32.mrb[0].mxu0
      %v202 = vpop.f32.mrb[0].mxu0
      %v203 = vadd.f32 0.0, %v202
      %v204 = vpop.f32.mrb[0].mxu0
      %205 = vmatprep.mubr.bf16.mxu0 0
      %206 = vmatmul.mubr.bf16.gmra.mrb[0].mxu0 %v135
      %v207 = vpop.f32.mrb[0].mxu0
      %v208 = vadd.f32 0.0, %v207
      %v209 = vpop.f32.mrb[0].mxu0
      %v210 = vpop.f32.mrb[0].mxu0
      %v211 = vadd.f32 0.0, %v210
      %v212 = vpop.f32.mrb[0].mxu0
      %213 = vmatprep.mubr.bf16.mxu0 0
      %214 = vmatmul.mubr.bf16.gmra.mrb[0].mxu0 %v138
      %v215 = vpop.f32.mrb[0].mxu0
      %v216 = vadd.f32 0.0, %v215
      %v217 = vpop.f32.mrb[0].mxu0
      %v218 = vpop.f32.mrb[0].mxu0
      %v219 = vadd.f32 0.0, %v218
      %v220 = vpop.f32.mrb[0].mxu0
      %221 = vmatprep.mubr.bf16.mxu0 0
      %222 = vmatmul.mubr.bf16.gmra.mrb[0].mxu0 %v141
      %v223 = vpop.f32.mrb[0].mxu0
      %v224 = vadd.f32 0.0, %v223
      %v225 = vpop.f32.mrb[0].mxu0
      %v226 = vpop.f32.mrb[0].mxu0
      %v227 = vadd.f32 0.0, %v226
      %v228 = vpop.f32.mrb[0].mxu0
      %229 = vmatprep.mubr.bf16.mxu0 0
      %230 = vmatmul.mubr.bf16.gmra.mrb[0].mxu0 %v144
      %v231 = vpop.f32.mrb[0].mxu0
      %v232 = vadd.f32 0.0, %v231
      %v233 = vpop.f32.mrb[0].mxu0
      %v234 = vpop.f32.mrb[0].mxu0
      %v235 = vadd.f32 0.0, %v234
      %v236 = vpop.f32.mrb[0].mxu0
      %237 = vmatprep.mubr.bf16.mxu0 0
      %238 = vmatmul.mubr.bf16.gmra.mrb[0].mxu0 %v147
      %v239 = vpop.f32.mrb[0].mxu0
      %v240 = vadd.f32 0.0, %v239
      %v241 = vpop.f32.mrb[0].mxu0
      %v242 = vpop.f32.mrb[0].mxu0
      %v243 = vadd.f32 0.0, %v242
      %v244 = vpop.f32.mrb[0].mxu0
      %245 = vdwg.mxu0
      %s246 = smul.u32 0, 128
      %s247 = scalar_lea.vmem [#allocation2], %s246
      %248 = vst [vmem:[%s247] sm:$0xff] %v184
      %249 = vst [vmem:[%s247 + $0x8] sm:$0xff] %v187
      %250 = vst [vmem:[%s247 + $0x10] sm:$0xff] %v192
      %251 = vst [vmem:[%s247 + $0x18] sm:$0xff] %v195
      %252 = vst [vmem:[%s247 + $0x20] sm:$0xff] %v200
      %253 = vst [vmem:[%s247 + $0x28] sm:$0xff] %v203
      %254 = vst [vmem:[%s247 + $0x30] sm:$0xff] %v208
      %255 = vst [vmem:[%s247 + $0x38] sm:$0xff] %v211
      %256 = vst [vmem:[%s247 + $0x40] sm:$0xff] %v216
      %257 = vst [vmem:[%s247 + $0x48] sm:$0xff] %v219
      %258 = vst [vmem:[%s247 + $0x50] sm:$0xff] %v224
      %259 = vst [vmem:[%s247 + $0x58] sm:$0xff] %v227
      %260 = vst [vmem:[%s247 + $0x60] sm:$0xff] %v232
      %261 = vst [vmem:[%s247 + $0x68] sm:$0xff] %v235
      %262 = vst [vmem:[%s247 + $0x70] sm:$0xff] %v240
      %263 = vst [vmem:[%s247 + $0x78] sm:$0xff] %v243
    $region21: #{tpu_custom_call.1} parent=1 // pred_fallthru
      _
    %p264 = scmp.eq.s32.totalorder 0, 0
    // Predicated region
    $region22: #{tpu_custom_call.1} parent=1 // pred_check
      %p265 = pneg %p264
    $region23: #{tpu_custom_call.1} parent=1 // pred_check_branch
      %267 = sbr.rel (%p265) target = $region25
    $region24: #{tpu_custom_call.1} parent=1 // pred_region
      %268 = vst [vmem:[#allocation5] sm:$0xff] 0.0
      %269 = vst [vmem:[#allocation5 + $0x8] sm:$0xff] 0.0
      %270 = vst [vmem:[#allocation5 + $0x10] sm:$0xff] 0.0
      %271 = vst [vmem:[#allocation5 + $0x18] sm:$0xff] 0.0
      %272 = vst [vmem:[#allocation5 + $0x20] sm:$0xff] 0.0
      %273 = vst [vmem:[#allocation5 + $0x28] sm:$0xff] 0.0
      %274 = vst [vmem:[#allocation5 + $0x30] sm:$0xff] 0.0
      %275 = vst [vmem:[#allocation5 + $0x38] sm:$0xff] 0.0
      %276 = vst [vmem:[#allocation5 + $0x40] sm:$0xff] 0.0
      %277 = vst [vmem:[#allocation5 + $0x48] sm:$0xff] 0.0
      %278 = vst [vmem:[#allocation5 + $0x50] sm:$0xff] 0.0
      %279 = vst [vmem:[#allocation5 + $0x58] sm:$0xff] 0.0
      %280 = vst [vmem:[#allocation5 + $0x60] sm:$0xff] 0.0
      %281 = vst [vmem:[#allocation5 + $0x68] sm:$0xff] 0.0
      %282 = vst [vmem:[#allocation5 + $0x70] sm:$0xff] 0.0
      %283 = vst [vmem:[#allocation5 + $0x78] sm:$0xff] 0.0
    $region25: #{tpu_custom_call.1} parent=1 // pred_fallthru
      _
    %s284 = smul.u32 0, 128
    %s285 = scalar_lea.vmem [#allocation2], %s284
    %v286 = vld [vmem:[%s285] sm:$0xff]
    %v287 = vld [vmem:[%s285 + $0x8] sm:$0xff]
    %v288 = vld [vmem:[%s285 + $0x10] sm:$0xff]
    %v289 = vld [vmem:[%s285 + $0x18] sm:$0xff]
    %v290 = vld [vmem:[%s285 + $0x20] sm:$0xff]
    %v291 = vld [vmem:[%s285 + $0x28] sm:$0xff]
    %v292 = vld [vmem:[%s285 + $0x30] sm:$0xff]
    %v293 = vld [vmem:[%s285 + $0x38] sm:$0xff]
    %v294 = vld [vmem:[%s285 + $0x40] sm:$0xff]
    %v295 = vld [vmem:[%s285 + $0x48] sm:$0xff]
    %v296 = vld [vmem:[%s285 + $0x50] sm:$0xff]
    %v297 = vld [vmem:[%s285 + $0x58] sm:$0xff]
    %v298 = vld [vmem:[%s285 + $0x60] sm:$0xff]
    %v299 = vld [vmem:[%s285 + $0x68] sm:$0xff]
    %v300 = vld [vmem:[%s285 + $0x70] sm:$0xff]
    %v301 = vld [vmem:[%s285 + $0x78] sm:$0xff]
    %v302 = vld [vmem:[#allocation5] sm:$0xff]
    %v303 = vld [vmem:[#allocation5 + $0x8] sm:$0xff]
    %v304 = vld [vmem:[#allocation5 + $0x10] sm:$0xff]
    %v305 = vld [vmem:[#allocation5 + $0x18] sm:$0xff]
    %v306 = vld [vmem:[#allocation5 + $0x20] sm:$0xff]
    %v307 = vld [vmem:[#allocation5 + $0x28] sm:$0xff]
    %v308 = vld [vmem:[#allocation5 + $0x30] sm:$0xff]
    %v309 = vld [vmem:[#allocation5 + $0x38] sm:$0xff]
    %v310 = vld [vmem:[#allocation5 + $0x40] sm:$0xff]
    %v311 = vld [vmem:[#allocation5 + $0x48] sm:$0xff]
    %v312 = vld [vmem:[#allocation5 + $0x50] sm:$0xff]
    %v313 = vld [vmem:[#allocation5 + $0x58] sm:$0xff]
    %v314 = vld [vmem:[#allocation5 + $0x60] sm:$0xff]
    %v315 = vld [vmem:[#allocation5 + $0x68] sm:$0xff]
    %v316 = vld [vmem:[#allocation5 + $0x70] sm:$0xff]
    %v317 = vld [vmem:[#allocation5 + $0x78] sm:$0xff]
    %v318 = vld [vmem:[%s3] sm:$0xff]
    %v319 = vld [vmem:[%s3 + $0x8] sm:$0xff]
    %v320 = vld [vmem:[%s3 + $0x10] sm:$0xff]
    %v321 = vld [vmem:[%s3 + $0x18] sm:$0xff]
    %v322 = vunpack.c.0.s8 %v318
    %v323 = vunpack.c.1.s8 %v318
    %v324 = vunpack.c.2.s8 %v318
    %v325 = vunpack.c.3.s8 %v318
    %v326 = vunpack.c.0.s8 %v319
    %v327 = vunpack.c.1.s8 %v319
    %v328 = vunpack.c.2.s8 %v319
    %v329 = vunpack.c.3.s8 %v319
    %v330 = vunpack.c.0.s8 %v320
    %v331 = vunpack.c.1.s8 %v320
    %v332 = vunpack.c.2.s8 %v320
    %v333 = vunpack.c.3.s8 %v320
    %v334 = vunpack.c.0.s8 %v321
    %v335 = vunpack.c.1.s8 %v321
    %v336 = vunpack.c.2.s8 %v321
    %v337 = vunpack.c.3.s8 %v321
    %v338 = vcvt.s32.f32 %v322
    %v339 = vcvt.s32.f32 %v323
    %v340 = vcvt.s32.f32 %v324
    %v341 = vcvt.s32.f32 %v325
    %v342 = vcvt.s32.f32 %v326
    %v343 = vcvt.s32.f32 %v327
    %v344 = vcvt.s32.f32 %v328
    %v345 = vcvt.s32.f32 %v329
    %v346 = vcvt.s32.f32 %v330
    %v347 = vcvt.s32.f32 %v331
    %v348 = vcvt.s32.f32 %v332
    %v349 = vcvt.s32.f32 %v333
    %v350 = vcvt.s32.f32 %v334
    %v351 = vcvt.s32.f32 %v335
    %v352 = vcvt.s32.f32 %v336
    %v353 = vcvt.s32.f32 %v337
    %354 = vmatprep.subr.mxu0 0.0
    %355 = vmatpush1.msra.mxu0 %v286
    %356 = vmatprep.subr.mxu0 0.0
    %357 = vmatpush1.msra.mxu0 %v287
    %358 = vmatprep.subr.mxu0 0.0
    %359 = vmatpush1.msra.mxu0 %v288
    %360 = vmatprep.subr.mxu0 0.0
    %361 = vmatpush1.msra.mxu0 %v289
    %362 = vmatprep.subr.mxu0 0.0
    %363 = vmatpush1.msra.mxu0 %v290
    %364 = vmatprep.subr.mxu0 0.0
    %365 = vmatpush1.msra.mxu0 %v291
    %366 = vmatprep.subr.mxu0 0.0
    %367 = vmatpush1.msra.mxu0 %v292
    %368 = vmatprep.subr.mxu0 0.0
    %369 = vmatpush1.msra.mxu0 %v293
    %370 = vmatprep.subr.mxu0 0.0
    %371 = vmatpush1.msra.mxu0 %v294
    %372 = vmatprep.subr.mxu0 0.0
    %373 = vmatpush1.msra.mxu0 %v295
    %374 = vmatprep.subr.mxu0 0.0
    %375 = vmatpush1.msra.mxu0 %v296
    %376 = vmatprep.subr.mxu0 0.0
    %377 = vmatpush1.msra.mxu0 %v297
    %378 = vmatprep.subr.mxu0 0.0
    %379 = vmatpush1.msra.mxu0 %v298
    %380 = vmatprep.subr.mxu0 0.0
    %381 = vmatpush1.msra.mxu0 %v299
    %382 = vmatprep.subr.mxu0 0.0
    %383 = vmatpush1.msra.mxu0 %v300
    %384 = vmatprep.subr.mxu0 0.0
    %385 = vmatpush1.msra.mxu0 %v301
    %386 = vmatprep.subr.mxu0 0.0
    %387 = vmatpush1.msra.mxu0 0.0
    %388 = vmatprep.subr.mxu0 0.0
    %389 = vmatpush1.msra.mxu0 0.0
    %390 = vmatprep.subr.mxu0 0.0
    %391 = vmatpush1.msra.mxu0 0.0
    %392 = vmatprep.subr.mxu0 0.0
    %393 = vmatpush1.msra.mxu0 0.0
    %394 = vmatprep.subr.mxu0 0.0
    %395 = vmatpush1.msra.mxu0 0.0
    %396 = vmatprep.subr.mxu0 0.0
    %397 = vmatpush1.msra.mxu0 0.0
    %398 = vmatprep.subr.mxu0 0.0
    %399 = vmatpush1.msra.mxu0 0.0
    %400 = vmatprep.subr.mxu0 0.0
    %401 = vmatpush1.msra.mxu0 0.0
    %402 = vmatprep.subr.mxu0 0.0
    %403 = vmatpush1.msra.mxu0 0.0
    %404 = vmatprep.subr.mxu0 0.0
    %405 = vmatpush1.msra.mxu0 0.0
    %406 = vmatprep.subr.mxu0 0.0
    %407 = vmatpush1.msra.mxu0 0.0
    %408 = vmatprep.subr.mxu0 0.0
    %409 = vmatpush1.msra.mxu0 0.0
    %410 = vmatprep.subr.mxu0 0.0
    %411 = vmatpush1.msra.mxu0 0.0
    %412 = vmatprep.subr.mxu0 0.0
    %413 = vmatpush1.msra.mxu0 0.0
    %414 = vmatprep.subr.mxu0 0.0
    %415 = vmatpush1.msra.mxu0 0.0
    %416 = vmatprep.subr.mxu0 0.0
    %417 = vmatpush1.msra.mxu0 0.0
    %418 = vmatprep.mubr.f32.mxu0 0.0
    %419 = vmatmul.mubr.f32.gmra.mrb[0].mxu0 %v338
    %v420 = vpop.f32.mrb[0].mxu0
    %v421 = vadd.f32 0.0, %v420
    %v422 = vpop.f32.mrb[0].mxu0
    %423 = vmatprep.mubr.f32.mxu0 0.0
    %424 = vmatmul.mubr.f32.gmra.mrb[0].mxu0 %v339
    %v425 = vpop.f32.mrb[0].mxu0
    %v426 = vadd.f32 0.0, %v425
    %v427 = vpop.f32.mrb[0].mxu0
    %428 = vmatprep.mubr.f32.mxu0 0.0
    %429 = vmatmul.mubr.f32.gmra.mrb[0].mxu0 %v340
    %v430 = vpop.f32.mrb[0].mxu0
    %v431 = vadd.f32 0.0, %v430
    %v432 = vpop.f32.mrb[0].mxu0
    %433 = vmatprep.mubr.f32.mxu0 0.0
    %434 = vmatmul.mubr.f32.gmra.mrb[0].mxu0 %v341
    %v435 = vpop.f32.mrb[0].mxu0
    %v436 = vadd.f32 0.0, %v435
    %v437 = vpop.f32.mrb[0].mxu0
    %438 = vmatprep.mubr.f32.mxu0 0.0
    %439 = vmatmul.mubr.f32.gmra.mrb[0].mxu0 %v342
    %v440 = vpop.f32.mrb[0].mxu0
    %v441 = vadd.f32 0.0, %v440
    %v442 = vpop.f32.mrb[0].mxu0
    %443 = vmatprep.mubr.f32.mxu0 0.0
    %444 = vmatmul.mubr.f32.gmra.mrb[0].mxu0 %v343
    %v445 = vpop.f32.mrb[0].mxu0
    %v446 = vadd.f32 0.0, %v445
    %v447 = vpop.f32.mrb[0].mxu0
    %448 = vmatprep.mubr.f32.mxu0 0.0
    %449 = vmatmul.mubr.f32.gmra.mrb[0].mxu0 %v344
    %v450 = vpop.f32.mrb[0].mxu0
    %v451 = vadd.f32 0.0, %v450
    %v452 = vpop.f32.mrb[0].mxu0
    %453 = vmatprep.mubr.f32.mxu0 0.0
    %454 = vmatmul.mubr.f32.gmra.mrb[0].mxu0 %v345
    %v455 = vpop.f32.mrb[0].mxu0
    %v456 = vadd.f32 0.0, %v455
    %v457 = vpop.f32.mrb[0].mxu0
    %458 = vmatprep.mubr.f32.mxu0 0.0
    %459 = vmatmul.mubr.f32.gmra.mrb[0].mxu0 %v346
    %v460 = vpop.f32.mrb[0].mxu0
    %v461 = vadd.f32 0.0, %v460
    %v462 = vpop.f32.mrb[0].mxu0
    %463 = vmatprep.mubr.f32.mxu0 0.0
    %464 = vmatmul.mubr.f32.gmra.mrb[0].mxu0 %v347
    %v465 = vpop.f32.mrb[0].mxu0
    %v466 = vadd.f32 0.0, %v465
    %v467 = vpop.f32.mrb[0].mxu0
    %468 = vmatprep.mubr.f32.mxu0 0.0
    %469 = vmatmul.mubr.f32.gmra.mrb[0].mxu0 %v348
    %v470 = vpop.f32.mrb[0].mxu0
    %v471 = vadd.f32 0.0, %v470
    %v472 = vpop.f32.mrb[0].mxu0
    %473 = vmatprep.mubr.f32.mxu0 0.0
    %474 = vmatmul.mubr.f32.gmra.mrb[0].mxu0 %v349
    %v475 = vpop.f32.mrb[0].mxu0
    %v476 = vadd.f32 0.0, %v475
    %v477 = vpop.f32.mrb[0].mxu0
    %478 = vmatprep.mubr.f32.mxu0 0.0
    %479 = vmatmul.mubr.f32.gmra.mrb[0].mxu0 %v350
    %v480 = vpop.f32.mrb[0].mxu0
    %v481 = vadd.f32 0.0, %v480
    %v482 = vpop.f32.mrb[0].mxu0
    %483 = vmatprep.mubr.f32.mxu0 0.0
    %484 = vmatmul.mubr.f32.gmra.mrb[0].mxu0 %v351
    %v485 = vpop.f32.mrb[0].mxu0
    %v486 = vadd.f32 0.0, %v485
    %v487 = vpop.f32.mrb[0].mxu0
    %488 = vmatprep.mubr.f32.mxu0 0.0
    %489 = vmatmul.mubr.f32.gmra.mrb[0].mxu0 %v352
    %v490 = vpop.f32.mrb[0].mxu0
    %v491 = vadd.f32 0.0, %v490
    %v492 = vpop.f32.mrb[0].mxu0
    %493 = vmatprep.mubr.f32.mxu0 0.0
    %494 = vmatmul.mubr.f32.gmra.mrb[0].mxu0 %v353
    %v495 = vpop.f32.mrb[0].mxu0
    %v496 = vadd.f32 0.0, %v495
    %v497 = vpop.f32.mrb[0].mxu0
    %498 = vdwg.mxu0
    %v499 = vadd.f32 %v302, %v421
    %v500 = vadd.f32 %v303, %v426
    %v501 = vadd.f32 %v304, %v431
    %v502 = vadd.f32 %v305, %v436
    %v503 = vadd.f32 %v306, %v441
    %v504 = vadd.f32 %v307, %v446
    %v505 = vadd.f32 %v308, %v451
    %v506 = vadd.f32 %v309, %v456
    %v507 = vadd.f32 %v310, %v461
    %v508 = vadd.f32 %v311, %v466
    %v509 = vadd.f32 %v312, %v471
    %v510 = vadd.f32 %v313, %v476
    %v511 = vadd.f32 %v314, %v481
    %v512 = vadd.f32 %v315, %v486
    %v513 = vadd.f32 %v316, %v491
    %v514 = vadd.f32 %v317, %v496
    %515 = vst [vmem:[#allocation5] sm:$0xff] %v499
    %516 = vst [vmem:[#allocation5 + $0x8] sm:$0xff] %v500
    %517 = vst [vmem:[#allocation5 + $0x10] sm:$0xff] %v501
    %518 = vst [vmem:[#allocation5 + $0x18] sm:$0xff] %v502
    %519 = vst [vmem:[#allocation5 + $0x20] sm:$0xff] %v503
    %520 = vst [vmem:[#allocation5 + $0x28] sm:$0xff] %v504
    %521 = vst [vmem:[#allocation5 + $0x30] sm:$0xff] %v505
    %522 = vst [vmem:[#allocation5 + $0x38] sm:$0xff] %v506
    %523 = vst [vmem:[#allocation5 + $0x40] sm:$0xff] %v507
    %524 = vst [vmem:[#allocation5 + $0x48] sm:$0xff] %v508
    %525 = vst [vmem:[#allocation5 + $0x50] sm:$0xff] %v509
    %526 = vst [vmem:[#allocation5 + $0x58] sm:$0xff] %v510
    %527 = vst [vmem:[#allocation5 + $0x60] sm:$0xff] %v511
    %528 = vst [vmem:[#allocation5 + $0x68] sm:$0xff] %v512
    %529 = vst [vmem:[#allocation5 + $0x70] sm:$0xff] %v513
    %530 = vst [vmem:[#allocation5 + $0x78] sm:$0xff] %v514
    %s531 = sld [smem:[#allocation4]]
    %p532 = scmp.ne.s32.totalorder %s531, 0
    %p533 = scmp.eq.s32.totalorder 0, 0
    %p534 = pnand %p532, %p533
    %p535 = pneg %p534
    // Predicated region
    $region26: #{tpu_custom_call.1} parent=1 // pred_check
      _
    $region27: #{tpu_custom_call.1} parent=1 // pred_check_branch
      %537 = sbr.rel (%p534) target = $region29
    $region28: #{tpu_custom_call.1} parent=1 // pred_region
      %v538 = vld [vmem:[#allocation5] sm:$0xff]
      %v539 = vld [vmem:[#allocation5 + $0x8] sm:$0xff]
      %v540 = vld [vmem:[#allocation5 + $0x10] sm:$0xff]
      %v541 = vld [vmem:[#allocation5 + $0x18] sm:$0xff]
      %v542 = vld [vmem:[#allocation5 + $0x20] sm:$0xff]
      %v543 = vld [vmem:[#allocation5 + $0x28] sm:$0xff]
      %v544 = vld [vmem:[#allocation5 + $0x30] sm:$0xff]
      %v545 = vld [vmem:[#allocation5 + $0x38] sm:$0xff]
      %v546 = vld [vmem:[#allocation5 + $0x40] sm:$0xff]
      %v547 = vld [vmem:[#allocation5 + $0x48] sm:$0xff]
      %v548 = vld [vmem:[#allocation5 + $0x50] sm:$0xff]
      %v549 = vld [vmem:[#allocation5 + $0x58] sm:$0xff]
      %v550 = vld [vmem:[#allocation5 + $0x60] sm:$0xff]
      %v551 = vld [vmem:[#allocation5 + $0x68] sm:$0xff]
      %v552 = vld [vmem:[#allocation5 + $0x70] sm:$0xff]
      %v553 = vld [vmem:[#allocation5 + $0x78] sm:$0xff]
      %v554 = vadd.f32 %v538, %v286
      %v555 = vadd.f32 %v539, %v287
      %v556 = vadd.f32 %v540, %v288
      %v557 = vadd.f32 %v541, %v289
      %v558 = vadd.f32 %v542, %v290
      %v559 = vadd.f32 %v543, %v291
      %v560 = vadd.f32 %v544, %v292
      %v561 = vadd.f32 %v545, %v293
      %v562 = vadd.f32 %v546, %v294
      %v563 = vadd.f32 %v547, %v295
      %v564 = vadd.f32 %v548, %v296
      %v565 = vadd.f32 %v549, %v297
      %v566 = vadd.f32 %v550, %v298
      %v567 = vadd.f32 %v551, %v299
      %v568 = vadd.f32 %v552, %v300
      %v569 = vadd.f32 %v553, %v301
      %570 = vst [vmem:[#allocation5] sm:$0xff] %v554
      %571 = vst [vmem:[#allocation5 + $0x8] sm:$0xff] %v555
      %572 = vst [vmem:[#allocation5 + $0x10] sm:$0xff] %v556
      %573 = vst [vmem:[#allocation5 + $0x18] sm:$0xff] %v557
      %574 = vst [vmem:[#allocation5 + $0x20] sm:$0xff] %v558
      %575 = vst [vmem:[#allocation5 + $0x28] sm:$0xff] %v559
      %576 = vst [vmem:[#allocation5 + $0x30] sm:$0xff] %v560
      %577 = vst [vmem:[#allocation5 + $0x38] sm:$0xff] %v561
      %578 = vst [vmem:[#allocation5 + $0x40] sm:$0xff] %v562
      %579 = vst [vmem:[#allocation5 + $0x48] sm:$0xff] %v563
      %580 = vst [vmem:[#allocation5 + $0x50] sm:$0xff] %v564
      %581 = vst [vmem:[#allocation5 + $0x58] sm:$0xff] %v565
      %582 = vst [vmem:[#allocation5 + $0x60] sm:$0xff] %v566
      %583 = vst [vmem:[#allocation5 + $0x68] sm:$0xff] %v567
      %584 = vst [vmem:[#allocation5 + $0x70] sm:$0xff] %v568
      %585 = vst [vmem:[#allocation5 + $0x78] sm:$0xff] %v569
    $region29: #{tpu_custom_call.1} parent=1 // pred_fallthru
      _
    // Predicated region
    $region30: #{tpu_custom_call.1} parent=1 // pred_check
      %p586 = pneg %p264
    $region31: #{tpu_custom_call.1} parent=1 // pred_check_branch
      %588 = sbr.rel (%p586) target = $region33
    $region32: #{tpu_custom_call.1} parent=1 // pred_region
      %v589 = vld [vmem:[#allocation5] sm:$0xff]
      %v590 = vld [vmem:[#allocation5 + $0x8] sm:$0xff]
      %v591 = vld [vmem:[#allocation5 + $0x10] sm:$0xff]
      %v592 = vld [vmem:[#allocation5 + $0x18] sm:$0xff]
      %v593 = vld [vmem:[#allocation5 + $0x20] sm:$0xff]
      %v594 = vld [vmem:[#allocation5 + $0x28] sm:$0xff]
      %v595 = vld [vmem:[#allocation5 + $0x30] sm:$0xff]
      %v596 = vld [vmem:[#allocation5 + $0x38] sm:$0xff]
      %v597 = vld [vmem:[#allocation5 + $0x40] sm:$0xff]
      %v598 = vld [vmem:[#allocation5 + $0x48] sm:$0xff]
      %v599 = vld [vmem:[#allocation5 + $0x50] sm:$0xff]
      %v600 = vld [vmem:[#allocation5 + $0x58] sm:$0xff]
      %v601 = vld [vmem:[#allocation5 + $0x60] sm:$0xff]
      %v602 = vld [vmem:[#allocation5 + $0x68] sm:$0xff]
      %v603 = vld [vmem:[#allocation5 + $0x70] sm:$0xff]
      %v604 = vld [vmem:[#allocation5 + $0x78] sm:$0xff]
      %v605 = vmax.f32 %v589, 0.0
      %v606 = vmax.f32 %v590, 0.0
      %v607 = vmax.f32 %v591, 0.0
      %v608 = vmax.f32 %v592, 0.0
      %v609 = vmax.f32 %v593, 0.0
      %v610 = vmax.f32 %v594, 0.0
      %v611 = vmax.f32 %v595, 0.0
      %v612 = vmax.f32 %v596, 0.0
      %v613 = vmax.f32 %v597, 0.0
      %v614 = vmax.f32 %v598, 0.0
      %v615 = vmax.f32 %v599, 0.0
      %v616 = vmax.f32 %v600, 0.0
      %v617 = vmax.f32 %v601, 0.0
      %v618 = vmax.f32 %v602, 0.0
      %v619 = vmax.f32 %v603, 0.0
      %v620 = vmax.f32 %v604, 0.0
      %v621 = vld [vmem:[%s4] sm:$0x1]
      %v623 = vlaneseq
      %v624 = vshrl.u32 %v623, 7
      %v625 = vsub.s32 0, %v624
      %v626 = vrot.slane %v621, %v625
      %v628 = vadd.f32 %v605, %v626
      %v629 = vadd.f32 %v606, %v626
      %v630 = vadd.f32 %v607, %v626
      %v631 = vadd.f32 %v608, %v626
      %v632 = vadd.f32 %v609, %v626
      %v633 = vadd.f32 %v610, %v626
      %v634 = vadd.f32 %v611, %v626
      %v635 = vadd.f32 %v612, %v626
      %v636 = vadd.f32 %v613, %v626
      %v637 = vadd.f32 %v614, %v626
      %v638 = vadd.f32 %v615, %v626
      %v639 = vadd.f32 %v616, %v626
      %v640 = vadd.f32 %v617, %v626
      %v641 = vadd.f32 %v618, %v626
      %v642 = vadd.f32 %v619, %v626
      %v643 = vadd.f32 %v620, %v626
      %644 = vst [vmem:[#allocation5] sm:$0xff] %v628
      %645 = vst [vmem:[#allocation5 + $0x8] sm:$0xff] %v629
      %646 = vst [vmem:[#allocation5 + $0x10] sm:$0xff] %v630
      %647 = vst [vmem:[#allocation5 + $0x18] sm:$0xff] %v631
      %648 = vst [vmem:[#allocation5 + $0x20] sm:$0xff] %v632
      %649 = vst [vmem:[#allocation5 + $0x28] sm:$0xff] %v633
      %650 = vst [vmem:[#allocation5 + $0x30] sm:$0xff] %v634
      %651 = vst [vmem:[#allocation5 + $0x38] sm:$0xff] %v635
      %652 = vst [vmem:[#allocation5 + $0x40] sm:$0xff] %v636
      %653 = vst [vmem:[#allocation5 + $0x48] sm:$0xff] %v637
      %654 = vst [vmem:[#allocation5 + $0x50] sm:$0xff] %v638
      %655 = vst [vmem:[#allocation5 + $0x58] sm:$0xff] %v639
      %656 = vst [vmem:[#allocation5 + $0x60] sm:$0xff] %v640
      %657 = vst [vmem:[#allocation5 + $0x68] sm:$0xff] %v641
      %658 = vst [vmem:[#allocation5 + $0x70] sm:$0xff] %v642
      %659 = vst [vmem:[#allocation5 + $0x78] sm:$0xff] %v643
    $region33: #{tpu_custom_call.1} parent=1 // pred_fallthru
      _
    // Predicated region
    $region34: #{tpu_custom_call.1} parent=1 // pred_check
      _
    $region35: #{tpu_custom_call.1} parent=1 // pred_check_branch
      %661 = sbr.rel (0) target = $region37
    $region36: #{tpu_custom_call.1} parent=1 // pred_region
      %s663 = ssub.s32 2048, 2048
      %664 = vsyncadd [#allocation6], %s663
      %s665 = sshll.u32 [#allocation5], 4
      %s666 = int_to_ptr.vmem [resolvable:$true] %s665
      %671 = dma.vmem_to_hbm [thread:$0]  %s666, 2048, %s5, [#allocation6], 128, 128, 8
    $region37: #{tpu_custom_call.1} parent=1 // pred_fallthru
      _
    // Predicated region
    $region38: #{tpu_custom_call.1} parent=1 // pred_check
      _
    $region39: #{tpu_custom_call.1} parent=1 // pred_check_branch
      %673 = sbr.rel (0) target = $region41
    $region40: #{tpu_custom_call.1} parent=1 // pred_region
      %674 = dma.done [#allocation6], 2048
    $region41: #{tpu_custom_call.1} parent=1 // pred_fallthru
      _
    %675 = vsyncpa [#allocation6], 1

</llo_original>
